<compile_context>
chip_gen: v6e
topology: v6e:2x2x1
jax: 0.10.0
libtpu: 0.0.40
codegen_flags: <defaults>
</compile_context>

<pallas_src>
import jax
import jax.numpy as jnp
from jax.experimental import pallas as pl
from jax.experimental.pallas import tpu as pltpu


# --------------------------------------------------------------------------
# Fused kernel:  out = rsqrt(clamp(rowsum(A),1)) * ( A @ (X * D_out^{-1/2}) )
#   grid = (dst_tile i, feat_tile j, src_tile k[reduction])
#   a_ref : (tile_n, tile_n) int8   A[dst_tile, src_tile] (0/1)
#   x_ref : (tile_n, tile_f) bf16   already pre-scaled by D_out^{-1/2}
#   o_ref : (tile_n, tile_f) feat.dtype
#   acc_ref: f32 accumulator, deg_ref: f32 in-degree accumulator
# --------------------------------------------------------------------------
def _aggregate_kernel(a_ref, x_ref, o_ref, acc_ref, deg_ref):
    k = pl.program_id(2)

    @pl.when(k == 0)
    def _():
        acc_ref[...] = jnp.zeros_like(acc_ref)
        deg_ref[...] = jnp.zeros_like(deg_ref)

    # int8 (0/1) -> bf16 upcast right before the MXU; exact.
    a = a_ref[...].astype(jnp.bfloat16)
    acc_ref[...] += jnp.dot(a, x_ref[...], preferred_element_type=jnp.float32)
    # Fused in-degree: row sums of this A tile (XLU work, hides under MXU/DMA).
    deg_ref[...] += jnp.sum(a, axis=1, keepdims=True, dtype=jnp.float32)

    @pl.when(k == pl.num_programs(2) - 1)
    def _():
        inv_in = jax.lax.rsqrt(jnp.maximum(deg_ref[...], 1.0))
        o_ref[...] = (acc_ref[...] * inv_in).astype(o_ref.dtype)


# --------------------------------------------------------------------------
# Wrapper
# --------------------------------------------------------------------------
def _round_up(x, m):
    return pl.cdiv(x, m) * m


def _pad_to(x, rows, cols):
    r, c = x.shape
    return jnp.pad(x, ((0, rows - r), (0, cols - c)))


def im_attention(adj, feat, *, tile_n=512, tile_f=512):
    """Pallas forward of IMAttention.

    adj:  (N, N) dense 0/1 adjacency, adj[dst, src] = 1 iff edge src -> dst.
    feat: (N, F) node features.
    """
    n, n2 = adj.shape
    assert n == n2, "expected a square dense adjacency"
    nf, f = feat.shape
    assert nf == n, "feat rows must match number of nodes"

    # Clamp tiles so small graphs/feature dims are not over-padded; keep
    # everything (8,128)-aligned and lane-dense.
    tile_n = min(tile_n, _round_up(n, 128))
    tile_f = min(tile_f, _round_up(f, 128))
    n_pad = _round_up(n, tile_n)
    f_pad = _round_up(f, tile_f)
    gn = n_pad // tile_n
    gf = f_pad // tile_f

    # ---- out-degree normalization folded into the features (f32, once) ----
    # One cheap XLA pass over adj; keeps A exactly 0/1 for the kernel.
    deg_out = jnp.maximum(jnp.sum(adj, axis=0, dtype=jnp.float32), 1.0)   # (N,)
    feat_scaled = feat.astype(jnp.float32) * jax.lax.rsqrt(deg_out)[:, None]

    # int8 adjacency (0/1 exact) halves the dominant HBM stream; zero padding
    # is semantics-preserving (padded nodes: deg 0 -> clamp 1 -> contribute 0).
    adj_p = _pad_to(adj.astype(jnp.int8), n_pad, n_pad)
    feat_p = _pad_to(feat_scaled.astype(jnp.bfloat16), n_pad, f_pad)

    out_dtype = feat.dtype
    out_itemsize = jnp.dtype(out_dtype).itemsize

    cost = pl.CostEstimate(
        flops=2 * n_pad * n_pad * f_pad,
        transcendentals=0,
        bytes_accessed=(gf * n_pad * n_pad * 1          # A tiles (int8), once per feature tile
                        + gn * n_pad * f_pad * 2        # X tiles (bf16), once per dst tile
                        + n_pad * f_pad * out_itemsize),
    )

    out_p = pl.pallas_call(
        _aggregate_kernel,
        out_shape=jax.ShapeDtypeStruct((n_pad, f_pad), out_dtype),
        grid_spec=pltpu.PrefetchScalarGridSpec(
            num_scalar_prefetch=0,
            grid=(gn, gf, gn),                                           # (dst, feat, src[reduce])
            in_specs=[
                pl.BlockSpec((tile_n, tile_n), lambda i, j, k: (i, k)),  # A tile (int8)
                pl.BlockSpec((tile_n, tile_f), lambda i, j, k: (k, j)),  # X tile (bf16, prescaled)
            ],
            out_specs=pl.BlockSpec((tile_n, tile_f), lambda i, j, k: (i, j)),
            scratch_shapes=[
                pltpu.VMEM((tile_n, tile_f), jnp.float32),               # matmul accumulator
                pltpu.VMEM((tile_n, 1), jnp.float32),                    # in-degree accumulator
            ],
        ),
        compiler_params=pltpu.CompilerParams(
            dimension_semantics=("parallel", "parallel", "arbitrary"),
            vmem_limit_bytes=48 * 1024 * 1024,   # headroom for large tiles, safe on v7x
        ),
        cost_estimate=cost,
    )(adj_p, feat_p)

    return out_p[:n, :f]


if __name__ == "__main__":
    key = jax.random.PRNGKey(0)
    N_NODES, F_DIM = 256, 64

    k_adj, k_feat = jax.random.split(key)

    # Random directed adjacency with self-loops (no zero-degree nodes).
    adj = jax.random.bernoulli(k_adj, p=0.1, shape=(N_NODES, N_NODES)).astype(jnp.float32)
    adj = jnp.maximum(adj, jnp.eye(N_NODES, dtype=jnp.float32))
    feat = jax.random.normal(k_feat, (N_NODES, F_DIM), dtype=jnp.float32)

    out = im_attention(adj, feat)
    out = jax.block_until_ready(out)

    # Pure-JAX f32 reference of the IMAttention forward.
    deg_in = jnp.maximum(jnp.sum(adj, axis=1), 1.0)    # in-degree per dst
    deg_out = jnp.maximum(jnp.sum(adj, axis=0), 1.0)   # out-degree per src
    ref = (adj @ (feat * jax.lax.rsqrt(deg_out)[:, None])) * jax.lax.rsqrt(deg_in)[:, None]

    assert out.shape == (N_NODES, F_DIM)
    assert out.dtype == feat.dtype
    assert bool(jnp.all(jnp.isfinite(out)))
    # A stays exact (0/1) in the kernel; only X is bf16-quantized, f32 accumulate.
    assert bool(jnp.allclose(out, ref, atol=2e-2, rtol=2e-2)), \
        f"max abs err {float(jnp.max(jnp.abs(out - ref)))}"
    print("KERNEL_OK")
</pallas_src>

<mosaic_0001>
module attributes {stable_mosaic.version = 11 : i64} {
  func.func @_aggregate_kernel(%arg0: i32, %arg1: i32, %arg2: i32, %arg3: memref<256x256xi8, #tpu.memory_space<vmem>>, %arg4: memref<256x128xbf16, #tpu.memory_space<vmem>>, %arg5: memref<256x128xf32, #tpu.memory_space<vmem>>, %arg6: memref<256x128xf32, #tpu.memory_space<vmem>>, %arg7: memref<256x1xf32, #tpu.memory_space<vmem>>) attributes {dimension_semantics = [#tpu.dimension_semantics<parallel>, #tpu.dimension_semantics<parallel>, #tpu.dimension_semantics<arbitrary>], iteration_bounds = array<i64: 1, 1, 1>, scalar_prefetch = 0 : i64, scratch_operands = 2 : i64, tpu.core_type = #tpu.core_type<tc>, window_params = [{transform_indices = @transform_0, window_bounds = array<i64: 256, 256>}, {transform_indices = @transform_1, window_bounds = array<i64: 256, 128>}, {transform_indices = @transform_2, window_bounds = array<i64: 256, 128>}]} {
    %c0_i32 = arith.constant 0 : i32
    %0 = arith.cmpi eq, %arg2, %c0_i32 : i32
    %1 = arith.extui %0 : i1 to i32
    %c0_i32_0 = arith.constant 0 : i32
    %2 = arith.cmpi ne, %1, %c0_i32_0 : i32
    scf.if %2 {
      %cst_15 = arith.constant 0.000000e+00 : f32
      %19 = vector.broadcast %cst_15 : f32 to vector<256x128xf32>
      %c0_16 = arith.constant 0 : index
      %c0_17 = arith.constant 0 : index
      %20 = vector.load %arg6[%c0_16, %c0_17] : memref<256x128xf32, #tpu.memory_space<vmem>>, vector<256x128xf32>
      tpu.vector_store %arg6[%c0_16, %c0_17], %19 {strides = array<i32>} : memref<256x128xf32, #tpu.memory_space<vmem>>, vector<256x128xf32>,
      %cst_18 = arith.constant 0.000000e+00 : f32
      %21 = vector.broadcast %cst_18 : f32 to vector<256x1xf32>
      %c0_19 = arith.constant 0 : index
      %c0_20 = arith.constant 0 : index
      %22 = vector.load %arg7[%c0_19, %c0_20] : memref<256x1xf32, #tpu.memory_space<vmem>>, vector<256x1xf32>
      tpu.vector_store %arg7[%c0_19, %c0_20], %21 {strides = array<i32>} : memref<256x1xf32, #tpu.memory_space<vmem>>, vector<256x1xf32>,
    } else {
    }
    %c0 = arith.constant 0 : index
    %c0_1 = arith.constant 0 : index
    %3 = vector.load %arg3[%c0, %c0_1] : memref<256x256xi8, #tpu.memory_space<vmem>>, vector<256x256xi8>
    %4 = arith.sitofp %3 : vector<256x256xi8> to vector<256x256xbf16>
    %c0_2 = arith.constant 0 : index
    %c0_3 = arith.constant 0 : index
    %5 = vector.load %arg6[%c0_2, %c0_3] : memref<256x128xf32, #tpu.memory_space<vmem>>, vector<256x128xf32>
    %c0_4 = arith.constant 0 : index
    %c0_5 = arith.constant 0 : index
    %6 = vector.load %arg4[%c0_4, %c0_5] : memref<256x128xbf16, #tpu.memory_space<vmem>>, vector<256x128xbf16>
    %cst = arith.constant dense<0.000000e+00> : vector<256x128xf32>
    %7 = tpu.matmul %4, %6, %cst {dimension_numbers = #tpu.dot_dimension_numbers<[1], [0], [0], [1], [0, 0, 1, 1], [], []>} : vector<256x256xbf16>, vector<256x128xbf16>, vector<256x128xf32> -> vector<256x128xf32>
    %8 = arith.addf %5, %7 : vector<256x128xf32>
    %c0_6 = arith.constant 0 : index
    %c0_7 = arith.constant 0 : index
    %9 = vector.load %arg6[%c0_6, %c0_7] : memref<256x128xf32, #tpu.memory_space<vmem>>, vector<256x128xf32>
    tpu.vector_store %arg6[%c0_6, %c0_7], %8 {strides = array<i32>} : memref<256x128xf32, #tpu.memory_space<vmem>>, vector<256x128xf32>,
    %c0_8 = arith.constant 0 : index
    %c0_9 = arith.constant 0 : index
    %10 = vector.load %arg7[%c0_8, %c0_9] : memref<256x1xf32, #tpu.memory_space<vmem>>, vector<256x1xf32>
    %11 = arith.extf %4 : vector<256x256xbf16> to vector<256x256xf32>
    %cst_10 = arith.constant dense<0.000000e+00> : vector<256xf32>
    %12 = vector.multi_reduction <add>, %11, %cst_10 [1] : vector<256x256xf32> to vector<256xf32>
    %13 = vector.shape_cast %12 : vector<256xf32> to vector<256x1xf32>
    %14 = arith.addf %10, %13 : vector<256x1xf32>
    %c0_11 = arith.constant 0 : index
    %c0_12 = arith.constant 0 : index
    %15 = vector.load %arg7[%c0_11, %c0_12] : memref<256x1xf32, #tpu.memory_space<vmem>>, vector<256x1xf32>
    tpu.vector_store %arg7[%c0_11, %c0_12], %14 {strides = array<i32>} : memref<256x1xf32, #tpu.memory_space<vmem>>, vector<256x1xf32>,
    %c0_i32_13 = arith.constant 0 : i32
    %16 = arith.cmpi eq, %arg2, %c0_i32_13 : i32
    %17 = arith.extui %16 : i1 to i32
    %c0_i32_14 = arith.constant 0 : i32
    %18 = arith.cmpi ne, %17, %c0_i32_14 : i32
    scf.if %18 {
      %c0_15 = arith.constant 0 : index
      %c0_16 = arith.constant 0 : index
      %19 = vector.load %arg7[%c0_15, %c0_16] : memref<256x1xf32, #tpu.memory_space<vmem>>, vector<256x1xf32>
      %cst_17 = arith.constant 1.000000e+00 : f32
      %20 = vector.broadcast %cst_17 : f32 to vector<256x1xf32>
      %21 = arith.maximumf %19, %20 : vector<256x1xf32>
      %22 = math.rsqrt %21 : vector<256x1xf32>
      %c0_18 = arith.constant 0 : index
      %c0_19 = arith.constant 0 : index
      %23 = vector.load %arg6[%c0_18, %c0_19] : memref<256x128xf32, #tpu.memory_space<vmem>>, vector<256x128xf32>
      %24 = vector.broadcast %22 : vector<256x1xf32> to vector<256x128xf32>
      %25 = arith.mulf %23, %24 : vector<256x128xf32>
      %c0_20 = arith.constant 0 : index
      %c0_21 = arith.constant 0 : index
      %26 = vector.load %arg5[%c0_20, %c0_21] : memref<256x128xf32, #tpu.memory_space<vmem>>, vector<256x128xf32>
      tpu.vector_store %arg5[%c0_20, %c0_21], %25 {strides = array<i32>} : memref<256x128xf32, #tpu.memory_space<vmem>>, vector<256x128xf32>,
    } else {
    }
    return
  }
  func.func @transform_0(%arg0: i32, %arg1: i32, %arg2: i32) -> (i32, i32) {
    %c0_i32 = arith.constant 0 : i32
    return %arg0, %arg2 : i32, i32
  }
  func.func @transform_1(%arg0: i32, %arg1: i32, %arg2: i32) -> (i32, i32) {
    %c0_i32 = arith.constant 0 : i32
    return %arg2, %arg1 : i32, i32
  }
  func.func @transform_2(%arg0: i32, %arg1: i32, %arg2: i32) -> (i32, i32) {
    %c0_i32 = arith.constant 0 : i32
    return %arg0, %arg1 : i32, i32
  }
}

</mosaic_0001>

<llo_original>
// kernel: tpu_custom_call.1
$region0: #{tpu_custom_call.1}
  #allocation0 [shape = 'u32[]', space=smem, size = 0x4, offset = 0x4, fixed_abs, tag = 'smem constant byte address 0x4 - core index']
  #allocation1 [shape = 'u32[144,128]{1,0:T(1,128)}', space=vmem, size = 0x12000, scoped, tag = 'internal scratch']
  #allocation2 [shape = 'f32[256,128]{1,0:T(8,128)}', space=vmem, size = 0x20000, scoped, tag = 'scratch operand']
  #allocation3 [shape = 'f32[256,1]{1,0:T(8,128)}', space=vmem, size = 0x20000, scoped, tag = 'scratch operand']
  %s0 = inlined_call_operand.hbm [shape: s8[256,256], index: 0, kind: input, shape index: {}]
  %s1 = inlined_call_operand.hbm [shape: bf16[256,128], index: 1, kind: input, shape index: {}]
  %s2 = inlined_call_operand.hbm [shape: f32[256,128], index: 2, kind: output, shape index: {}]
  %s3 = sld [smem:[#allocation0]]
  $region34: #{tpu_custom_call.1} parent=0
    _
  %s5 = ssub.s32 1, %s3
  %s6 = scalar_select 0, %s5, %s3
  $region1: #{tpu_custom_call.1} parent=0
    #allocation4 [shape = 'u8[65536]{0}', space=vmem, size = 0x10000, scoped, tag = 'input window, operand 0, single buffered']
    #allocation5 [shape = 's32[1]{0}', space=sflag, size = 0x4, scoped, tag = 'scoped memory for tpu_custom_call.1']
    #allocation6 [shape = 's32[1]{0}', space=sflag, size = 0x4, scoped, tag = 'scoped memory for tpu_custom_call.1']
    #allocation7 [shape = 'u8[65536]{0}', space=vmem, size = 0x10000, scoped, tag = 'input window, operand 1, single buffered']
    #allocation8 [shape = 's32[1]{0}', space=sflag, size = 0x4, scoped, tag = 'scoped memory for tpu_custom_call.1']
    #allocation9 [shape = 'u8[131072]{0}', space=vmem, size = 0x20000, scoped, tag = 'output window, operand 0, single buffered']
    %7 = vsyncpa [#allocation5], 0
    %8 = vsyncpa [#allocation8], 0
    %9 = vsyncpa [#allocation6], 0
    // Predicated region
    $region2: #{tpu_custom_call.1} parent=1 // pred_check
      _
    $region3: #{tpu_custom_call.1} parent=1 // pred_check_branch
      %11 = sbr.rel (0) target = $region5
    $region4: #{tpu_custom_call.1} parent=1 // pred_region
      %s13 = ssub.s32 2048, 2048
      %14 = vsyncadd [#allocation5], %s13
      %s15 = sshll.u32 [#allocation4], 4
      %s16 = int_to_ptr.vmem [resolvable:$true] %s15
      %21 = dma.hbm_to_vmem [thread:$0]  %s0, 2048, %s16, [#allocation5], 256, 256, 16
    $region5: #{tpu_custom_call.1} parent=1 // pred_fallthru
      _
    // Predicated region
    $region6: #{tpu_custom_call.1} parent=1 // pred_check
      _
    $region7: #{tpu_custom_call.1} parent=1 // pred_check_branch
      %23 = sbr.rel (0) target = $region9
    $region8: #{tpu_custom_call.1} parent=1 // pred_region
      %s25 = ssub.s32 2048, 2048
      %26 = vsyncadd [#allocation8], %s25
      %s27 = sshll.u32 [#allocation7], 4
      %s28 = int_to_ptr.vmem [resolvable:$true] %s27
      %33 = dma.hbm_to_vmem [thread:$0]  %s1, 2048, %s28, [#allocation8], 64, 64, 4
    $region9: #{tpu_custom_call.1} parent=1 // pred_fallthru
      _
    // Predicated region
    $region10: #{tpu_custom_call.1} parent=1 // pred_check
      _
    $region11: #{tpu_custom_call.1} parent=1 // pred_check_branch
      %35 = sbr.rel (0) target = $region13
    $region12: #{tpu_custom_call.1} parent=1 // pred_region
      %36 = dma.done [#allocation5], 2048
    $region13: #{tpu_custom_call.1} parent=1 // pred_fallthru
      _
    // Predicated region
    $region14: #{tpu_custom_call.1} parent=1 // pred_check
      _
    $region15: #{tpu_custom_call.1} parent=1 // pred_check_branch
      %38 = sbr.rel (0) target = $region17
    $region16: #{tpu_custom_call.1} parent=1 // pred_region
      %39 = dma.done [#allocation8], 2048
    $region17: #{tpu_custom_call.1} parent=1 // pred_fallthru
      _
    %p41 = scmp.eq.s32.totalorder 0, 0
    // Predicated region
    $region18: #{tpu_custom_call.1} parent=1 // pred_check
      %p42 = pneg %p41
    $region19: #{tpu_custom_call.1} parent=1 // pred_check_branch
      %44 = sbr.rel (%p42) target = $region21
    $region20: #{tpu_custom_call.1} parent=1 // pred_region
      %45 = vst [vmem:[#allocation2] sm:$0xff] 0.0
      %46 = vst [vmem:[#allocation2 + $0x8] sm:$0xff] 0.0
      %47 = vst [vmem:[#allocation2 + $0x10] sm:$0xff] 0.0
      %48 = vst [vmem:[#allocation2 + $0x18] sm:$0xff] 0.0
      %49 = vst [vmem:[#allocation2 + $0x20] sm:$0xff] 0.0
      %50 = vst [vmem:[#allocation2 + $0x28] sm:$0xff] 0.0
      %51 = vst [vmem:[#allocation2 + $0x30] sm:$0xff] 0.0
      %52 = vst [vmem:[#allocation2 + $0x38] sm:$0xff] 0.0
      %53 = vst [vmem:[#allocation2 + $0x40] sm:$0xff] 0.0
      %54 = vst [vmem:[#allocation2 + $0x48] sm:$0xff] 0.0
      %55 = vst [vmem:[#allocation2 + $0x50] sm:$0xff] 0.0
      %56 = vst [vmem:[#allocation2 + $0x58] sm:$0xff] 0.0
      %57 = vst [vmem:[#allocation2 + $0x60] sm:$0xff] 0.0
      %58 = vst [vmem:[#allocation2 + $0x68] sm:$0xff] 0.0
      %59 = vst [vmem:[#allocation2 + $0x70] sm:$0xff] 0.0
      %60 = vst [vmem:[#allocation2 + $0x78] sm:$0xff] 0.0
      %61 = vst [vmem:[#allocation2 + $0x80] sm:$0xff] 0.0
      %62 = vst [vmem:[#allocation2 + $0x88] sm:$0xff] 0.0
      %63 = vst [vmem:[#allocation2 + $0x90] sm:$0xff] 0.0
      %64 = vst [vmem:[#allocation2 + $0x98] sm:$0xff] 0.0
      %65 = vst [vmem:[#allocation2 + $0xa0] sm:$0xff] 0.0
      %66 = vst [vmem:[#allocation2 + $0xa8] sm:$0xff] 0.0
      %67 = vst [vmem:[#allocation2 + $0xb0] sm:$0xff] 0.0
      %68 = vst [vmem:[#allocation2 + $0xb8] sm:$0xff] 0.0
      %69 = vst [vmem:[#allocation2 + $0xc0] sm:$0xff] 0.0
      %70 = vst [vmem:[#allocation2 + $0xc8] sm:$0xff] 0.0
      %71 = vst [vmem:[#allocation2 + $0xd0] sm:$0xff] 0.0
      %72 = vst [vmem:[#allocation2 + $0xd8] sm:$0xff] 0.0
      %73 = vst [vmem:[#allocation2 + $0xe0] sm:$0xff] 0.0
      %74 = vst [vmem:[#allocation2 + $0xe8] sm:$0xff] 0.0
      %75 = vst [vmem:[#allocation2 + $0xf0] sm:$0xff] 0.0
      %76 = vst [vmem:[#allocation2 + $0xf8] sm:$0xff] 0.0
      %vm77 = vcmask 7168
      %78 = vst.msk [vmem:[#allocation3] sm:$0xff] %vm77, 0.0
      %79 = vst.msk [vmem:[#allocation3 + $0x8] sm:$0xff] %vm77, 0.0
      %80 = vst.msk [vmem:[#allocation3 + $0x10] sm:$0xff] %vm77, 0.0
      %81 = vst.msk [vmem:[#allocation3 + $0x18] sm:$0xff] %vm77, 0.0
      %82 = vst.msk [vmem:[#allocation3 + $0x20] sm:$0xff] %vm77, 0.0
      %83 = vst.msk [vmem:[#allocation3 + $0x28] sm:$0xff] %vm77, 0.0
      %84 = vst.msk [vmem:[#allocation3 + $0x30] sm:$0xff] %vm77, 0.0
      %85 = vst.msk [vmem:[#allocation3 + $0x38] sm:$0xff] %vm77, 0.0
      %86 = vst.msk [vmem:[#allocation3 + $0x40] sm:$0xff] %vm77, 0.0
      %87 = vst.msk [vmem:[#allocation3 + $0x48] sm:$0xff] %vm77, 0.0
      %88 = vst.msk [vmem:[#allocation3 + $0x50] sm:$0xff] %vm77, 0.0
      %89 = vst.msk [vmem:[#allocation3 + $0x58] sm:$0xff] %vm77, 0.0
      %90 = vst.msk [vmem:[#allocation3 + $0x60] sm:$0xff] %vm77, 0.0
      %91 = vst.msk [vmem:[#allocation3 + $0x68] sm:$0xff] %vm77, 0.0
      %92 = vst.msk [vmem:[#allocation3 + $0x70] sm:$0xff] %vm77, 0.0
      %93 = vst.msk [vmem:[#allocation3 + $0x78] sm:$0xff] %vm77, 0.0
      %94 = vst.msk [vmem:[#allocation3 + $0x80] sm:$0xff] %vm77, 0.0
      %95 = vst.msk [vmem:[#allocation3 + $0x88] sm:$0xff] %vm77, 0.0
      %96 = vst.msk [vmem:[#allocation3 + $0x90] sm:$0xff] %vm77, 0.0
      %97 = vst.msk [vmem:[#allocation3 + $0x98] sm:$0xff] %vm77, 0.0
      %98 = vst.msk [vmem:[#allocation3 + $0xa0] sm:$0xff] %vm77, 0.0
      %99 = vst.msk [vmem:[#allocation3 + $0xa8] sm:$0xff] %vm77, 0.0
      %100 = vst.msk [vmem:[#allocation3 + $0xb0] sm:$0xff] %vm77, 0.0
      %101 = vst.msk [vmem:[#allocation3 + $0xb8] sm:$0xff] %vm77, 0.0
      %102 = vst.msk [vmem:[#allocation3 + $0xc0] sm:$0xff] %vm77, 0.0
      %103 = vst.msk [vmem:[#allocation3 + $0xc8] sm:$0xff] %vm77, 0.0
      %104 = vst.msk [vmem:[#allocation3 + $0xd0] sm:$0xff] %vm77, 0.0
      %105 = vst.msk [vmem:[#allocation3 + $0xd8] sm:$0xff] %vm77, 0.0
      %106 = vst.msk [vmem:[#allocation3 + $0xe0] sm:$0xff] %vm77, 0.0
      %107 = vst.msk [vmem:[#allocation3 + $0xe8] sm:$0xff] %vm77, 0.0
      %108 = vst.msk [vmem:[#allocation3 + $0xf0] sm:$0xff] %vm77, 0.0
      %109 = vst.msk [vmem:[#allocation3 + $0xf8] sm:$0xff] %vm77, 0.0
    $region21: #{tpu_custom_call.1} parent=1 // pred_fallthru
      _
    %v110 = vld [vmem:[#allocation4] sm:$0xff]
    %v111 = vld [vmem:[#allocation4 + $0x8] sm:$0xff]
    %v112 = vld [vmem:[#allocation4 + $0x10] sm:$0xff]
    %v113 = vld [vmem:[#allocation4 + $0x18] sm:$0xff]
    %v114 = vld [vmem:[#allocation4 + $0x20] sm:$0xff]
    %v115 = vld [vmem:[#allocation4 + $0x28] sm:$0xff]
    %v116 = vld [vmem:[#allocation4 + $0x30] sm:$0xff]
    %v117 = vld [vmem:[#allocation4 + $0x38] sm:$0xff]
    %v118 = vld [vmem:[#allocation4 + $0x40] sm:$0xff]
    %v119 = vld [vmem:[#allocation4 + $0x48] sm:$0xff]
    %v120 = vld [vmem:[#allocation4 + $0x50] sm:$0xff]
    %v121 = vld [vmem:[#allocation4 + $0x58] sm:$0xff]
    %v122 = vld [vmem:[#allocation4 + $0x60] sm:$0xff]
    %v123 = vld [vmem:[#allocation4 + $0x68] sm:$0xff]
    %v124 = vld [vmem:[#allocation4 + $0x70] sm:$0xff]
    %v125 = vld [vmem:[#allocation4 + $0x78] sm:$0xff]
    %v126 = vunpack.c.l.s8.bf16 %v110
    %v127 = vunpack.c.l.s8.bf16 %v111
    %v128 = vunpack.c.h.s8.bf16 %v110
    %v129 = vunpack.c.h.s8.bf16 %v111
    %v130 = vunpack.c.l.s8.bf16 %v112
    %v131 = vunpack.c.l.s8.bf16 %v113
    %v132 = vunpack.c.h.s8.bf16 %v112
    %v133 = vunpack.c.h.s8.bf16 %v113
    %v134 = vunpack.c.l.s8.bf16 %v114
    %v135 = vunpack.c.l.s8.bf16 %v115
    %v136 = vunpack.c.h.s8.bf16 %v114
    %v137 = vunpack.c.h.s8.bf16 %v115
    %v138 = vunpack.c.l.s8.bf16 %v116
    %v139 = vunpack.c.l.s8.bf16 %v117
    %v140 = vunpack.c.h.s8.bf16 %v116
    %v141 = vunpack.c.h.s8.bf16 %v117
    %v142 = vunpack.c.l.s8.bf16 %v118
    %v143 = vunpack.c.l.s8.bf16 %v119
    %v144 = vunpack.c.h.s8.bf16 %v118
    %v145 = vunpack.c.h.s8.bf16 %v119
    %v146 = vunpack.c.l.s8.bf16 %v120
    %v147 = vunpack.c.l.s8.bf16 %v121
    %v148 = vunpack.c.h.s8.bf16 %v120
    %v149 = vunpack.c.h.s8.bf16 %v121
    %v150 = vunpack.c.l.s8.bf16 %v122
    %v151 = vunpack.c.l.s8.bf16 %v123
    %v152 = vunpack.c.h.s8.bf16 %v122
    %v153 = vunpack.c.h.s8.bf16 %v123
    %v154 = vunpack.c.l.s8.bf16 %v124
    %v155 = vunpack.c.l.s8.bf16 %v125
    %v156 = vunpack.c.h.s8.bf16 %v124
    %v157 = vunpack.c.h.s8.bf16 %v125
    %v158 = vld [vmem:[#allocation2] sm:$0xff]
    %v159 = vld [vmem:[#allocation2 + $0x8] sm:$0xff]
    %v160 = vld [vmem:[#allocation2 + $0x10] sm:$0xff]
    %v161 = vld [vmem:[#allocation2 + $0x18] sm:$0xff]
    %v162 = vld [vmem:[#allocation2 + $0x20] sm:$0xff]
    %v163 = vld [vmem:[#allocation2 + $0x28] sm:$0xff]
    %v164 = vld [vmem:[#allocation2 + $0x30] sm:$0xff]
    %v165 = vld [vmem:[#allocation2 + $0x38] sm:$0xff]
    %v166 = vld [vmem:[#allocation2 + $0x40] sm:$0xff]
    %v167 = vld [vmem:[#allocation2 + $0x48] sm:$0xff]
    %v168 = vld [vmem:[#allocation2 + $0x50] sm:$0xff]
    %v169 = vld [vmem:[#allocation2 + $0x58] sm:$0xff]
    %v170 = vld [vmem:[#allocation2 + $0x60] sm:$0xff]
    %v171 = vld [vmem:[#allocation2 + $0x68] sm:$0xff]
    %v172 = vld [vmem:[#allocation2 + $0x70] sm:$0xff]
    %v173 = vld [vmem:[#allocation2 + $0x78] sm:$0xff]
    %v174 = vld [vmem:[#allocation2 + $0x80] sm:$0xff]
    %v175 = vld [vmem:[#allocation2 + $0x88] sm:$0xff]
    %v176 = vld [vmem:[#allocation2 + $0x90] sm:$0xff]
    %v177 = vld [vmem:[#allocation2 + $0x98] sm:$0xff]
    %v178 = vld [vmem:[#allocation2 + $0xa0] sm:$0xff]
    %v179 = vld [vmem:[#allocation2 + $0xa8] sm:$0xff]
    %v180 = vld [vmem:[#allocation2 + $0xb0] sm:$0xff]
    %v181 = vld [vmem:[#allocation2 + $0xb8] sm:$0xff]
    %v182 = vld [vmem:[#allocation2 + $0xc0] sm:$0xff]
    %v183 = vld [vmem:[#allocation2 + $0xc8] sm:$0xff]
    %v184 = vld [vmem:[#allocation2 + $0xd0] sm:$0xff]
    %v185 = vld [vmem:[#allocation2 + $0xd8] sm:$0xff]
    %v186 = vld [vmem:[#allocation2 + $0xe0] sm:$0xff]
    %v187 = vld [vmem:[#allocation2 + $0xe8] sm:$0xff]
    %v188 = vld [vmem:[#allocation2 + $0xf0] sm:$0xff]
    %v189 = vld [vmem:[#allocation2 + $0xf8] sm:$0xff]
    %v190 = vld [vmem:[#allocation7] sm:$0xf]
    %v191 = vld [vmem:[#allocation7 + $0x4] sm:$0xf]
    %v192 = vld [vmem:[#allocation7 + $0x8] sm:$0xf]
    %v193 = vld [vmem:[#allocation7 + $0xc] sm:$0xf]
    %v194 = vld [vmem:[#allocation7 + $0x10] sm:$0xf]
    %v195 = vld [vmem:[#allocation7 + $0x14] sm:$0xf]
    %v196 = vld [vmem:[#allocation7 + $0x18] sm:$0xf]
    %v197 = vld [vmem:[#allocation7 + $0x1c] sm:$0xf]
    %v198 = vld [vmem:[#allocation7 + $0x20] sm:$0xf]
    %v199 = vld [vmem:[#allocation7 + $0x24] sm:$0xf]
    %v200 = vld [vmem:[#allocation7 + $0x28] sm:$0xf]
    %v201 = vld [vmem:[#allocation7 + $0x2c] sm:$0xf]
    %v202 = vld [vmem:[#allocation7 + $0x30] sm:$0xf]
    %v203 = vld [vmem:[#allocation7 + $0x34] sm:$0xf]
    %v204 = vld [vmem:[#allocation7 + $0x38] sm:$0xf]
    %v205 = vld [vmem:[#allocation7 + $0x3c] sm:$0xf]
    %v206 = vld [vmem:[#allocation7 + $0x40] sm:$0xf]
    %v207 = vld [vmem:[#allocation7 + $0x44] sm:$0xf]
    %v208 = vld [vmem:[#allocation7 + $0x48] sm:$0xf]
    %v209 = vld [vmem:[#allocation7 + $0x4c] sm:$0xf]
    %v210 = vld [vmem:[#allocation7 + $0x50] sm:$0xf]
    %v211 = vld [vmem:[#allocation7 + $0x54] sm:$0xf]
    %v212 = vld [vmem:[#allocation7 + $0x58] sm:$0xf]
    %v213 = vld [vmem:[#allocation7 + $0x5c] sm:$0xf]
    %v214 = vld [vmem:[#allocation7 + $0x60] sm:$0xf]
    %v215 = vld [vmem:[#allocation7 + $0x64] sm:$0xf]
    %v216 = vld [vmem:[#allocation7 + $0x68] sm:$0xf]
    %v217 = vld [vmem:[#allocation7 + $0x6c] sm:$0xf]
    %v218 = vld [vmem:[#allocation7 + $0x70] sm:$0xf]
    %v219 = vld [vmem:[#allocation7 + $0x74] sm:$0xf]
    %v220 = vld [vmem:[#allocation7 + $0x78] sm:$0xf]
    %v221 = vld [vmem:[#allocation7 + $0x7c] sm:$0xf]
    %v254 = vunpack.c.l.b16 %v190
    %v255 = vunpack.c.l.b16 %v191
    %v256 = vunpack.c.l.b16 %v192
    %v257 = vunpack.c.l.b16 %v193
    %v258 = vunpack.c.l.b16 %v194
    %v259 = vunpack.c.l.b16 %v195
    %v260 = vunpack.c.l.b16 %v196
    %v261 = vunpack.c.l.b16 %v197
    %v262 = vunpack.c.l.b16 %v198
    %v263 = vunpack.c.l.b16 %v199
    %v264 = vunpack.c.l.b16 %v200
    %v265 = vunpack.c.l.b16 %v201
    %v266 = vunpack.c.l.b16 %v202
    %v267 = vunpack.c.l.b16 %v203
    %v268 = vunpack.c.l.b16 %v204
    %v269 = vunpack.c.l.b16 %v205
    %v270 = vunpack.c.l.b16 %v206
    %v271 = vunpack.c.l.b16 %v207
    %v272 = vunpack.c.l.b16 %v208
    %v273 = vunpack.c.l.b16 %v209
    %v274 = vunpack.c.l.b16 %v210
    %v275 = vunpack.c.l.b16 %v211
    %v276 = vunpack.c.l.b16 %v212
    %v277 = vunpack.c.l.b16 %v213
    %v278 = vunpack.c.l.b16 %v214
    %v279 = vunpack.c.l.b16 %v215
    %v280 = vunpack.c.l.b16 %v216
    %v281 = vunpack.c.l.b16 %v217
    %v282 = vunpack.c.l.b16 %v218
    %v283 = vunpack.c.l.b16 %v219
    %v284 = vunpack.c.l.b16 %v220
    %v285 = vunpack.c.l.b16 %v221
    %v286 = vpack.c.b16 %v255, %v254
    %v287 = vpack.c.b16 %v257, %v256
    %v288 = vpack.c.b16 %v259, %v258
    %v289 = vpack.c.b16 %v261, %v260
    %v290 = vpack.c.b16 %v263, %v262
    %v291 = vpack.c.b16 %v265, %v264
    %v292 = vpack.c.b16 %v267, %v266
    %v293 = vpack.c.b16 %v269, %v268
    %v294 = vpack.c.b16 %v271, %v270
    %v295 = vpack.c.b16 %v273, %v272
    %v296 = vpack.c.b16 %v275, %v274
    %v297 = vpack.c.b16 %v277, %v276
    %v298 = vpack.c.b16 %v279, %v278
    %v299 = vpack.c.b16 %v281, %v280
    %v300 = vpack.c.b16 %v283, %v282
    %v301 = vpack.c.b16 %v285, %v284
    %318 = vmatprep.subr.bf16.mxu0 0
    %319 = vmatpush1.bf16.msra.mxu0 %v293
    %320 = vmatprep.subr.bf16.mxu0 0
    %321 = vmatpush1.bf16.msra.mxu0 %v292
    %322 = vmatprep.subr.bf16.mxu0 0
    %323 = vmatpush1.bf16.msra.mxu0 %v291
    %324 = vmatprep.subr.bf16.mxu0 0
    %325 = vmatpush1.bf16.msra.mxu0 %v290
    %326 = vmatprep.subr.bf16.mxu0 0
    %327 = vmatpush1.bf16.msra.mxu0 %v289
    %328 = vmatprep.subr.bf16.mxu0 0
    %329 = vmatpush1.bf16.msra.mxu0 %v288
    %330 = vmatprep.subr.bf16.mxu0 0
    %331 = vmatpush1.bf16.msra.mxu0 %v287
    %332 = vmatprep.subr.bf16.mxu0 0
    %333 = vmatpush1.bf16.msra.mxu0 %v286
    %334 = vmatprep.subr.bf16.mxu0 0
    %335 = vmatpush2.bf16.msra.mxu0 %v301
    %336 = vmatprep.subr.bf16.mxu0 0
    %337 = vmatpush2.bf16.msra.mxu0 %v300
    %338 = vmatprep.subr.bf16.mxu0 0
    %339 = vmatpush2.bf16.msra.mxu0 %v299
    %340 = vmatprep.subr.bf16.mxu0 0
    %341 = vmatpush2.bf16.msra.mxu0 %v298
    %342 = vmatprep.subr.bf16.mxu0 0
    %343 = vmatpush2.bf16.msra.mxu0 %v297
    %344 = vmatprep.subr.bf16.mxu0 0
    %345 = vmatpush2.bf16.msra.mxu0 %v296
    %346 = vmatprep.subr.bf16.mxu0 0
    %347 = vmatpush2.bf16.msra.mxu0 %v295
    %348 = vmatprep.subr.bf16.mxu0 0
    %349 = vmatpush2.bf16.msra.mxu0 %v294
    %350 = vmatprep.mubr.bf16.mxu0 %v127
    %351 = vmatmul.mubr.bf16.gmra.mxu0 %v126
    %v352 = vpop.f32.mrf.mxu0
    %v353 = vadd.f32 0.0, %v352
    %v354 = vpop.f32.mrf.mxu0
    %v355 = vpop.f32.mrf.mxu0
    %v356 = vadd.f32 0.0, %v355
    %v357 = vpop.f32.mrf.mxu0
    %358 = vmatprep.mubr.bf16.mxu0 %v129
    %359 = vmatmul.mubr.bf16.gmra.mxu0 %v128
    %v360 = vpop.f32.mrf.mxu0
    %v361 = vadd.f32 0.0, %v360
    %v362 = vpop.f32.mrf.mxu0
    %v363 = vpop.f32.mrf.mxu0
    %v364 = vadd.f32 0.0, %v363
    %v365 = vpop.f32.mrf.mxu0
    %366 = vmatprep.mubr.bf16.mxu0 %v131
    %367 = vmatmul.mubr.bf16.gmra.mxu0 %v130
    %v368 = vpop.f32.mrf.mxu0
    %v369 = vadd.f32 0.0, %v368
    %v370 = vpop.f32.mrf.mxu0
    %v371 = vpop.f32.mrf.mxu0
    %v372 = vadd.f32 0.0, %v371
    %v373 = vpop.f32.mrf.mxu0
    %374 = vmatprep.mubr.bf16.mxu0 %v133
    %375 = vmatmul.mubr.bf16.gmra.mxu0 %v132
    %v376 = vpop.f32.mrf.mxu0
    %v377 = vadd.f32 0.0, %v376
    %v378 = vpop.f32.mrf.mxu0
    %v379 = vpop.f32.mrf.mxu0
    %v380 = vadd.f32 0.0, %v379
    %v381 = vpop.f32.mrf.mxu0
    %382 = vmatprep.mubr.bf16.mxu0 %v135
    %383 = vmatmul.mubr.bf16.gmra.mxu0 %v134
    %v384 = vpop.f32.mrf.mxu0
    %v385 = vadd.f32 0.0, %v384
    %v386 = vpop.f32.mrf.mxu0
    %v387 = vpop.f32.mrf.mxu0
    %v388 = vadd.f32 0.0, %v387
    %v389 = vpop.f32.mrf.mxu0
    %390 = vmatprep.mubr.bf16.mxu0 %v137
    %391 = vmatmul.mubr.bf16.gmra.mxu0 %v136
    %v392 = vpop.f32.mrf.mxu0
    %v393 = vadd.f32 0.0, %v392
    %v394 = vpop.f32.mrf.mxu0
    %v395 = vpop.f32.mrf.mxu0
    %v396 = vadd.f32 0.0, %v395
    %v397 = vpop.f32.mrf.mxu0
    %398 = vmatprep.mubr.bf16.mxu0 %v139
    %399 = vmatmul.mubr.bf16.gmra.mxu0 %v138
    %v400 = vpop.f32.mrf.mxu0
    %v401 = vadd.f32 0.0, %v400
    %v402 = vpop.f32.mrf.mxu0
    %v403 = vpop.f32.mrf.mxu0
    %v404 = vadd.f32 0.0, %v403
    %v405 = vpop.f32.mrf.mxu0
    %406 = vmatprep.mubr.bf16.mxu0 %v141
    %407 = vmatmul.mubr.bf16.gmra.mxu0 %v140
    %v408 = vpop.f32.mrf.mxu0
    %v409 = vadd.f32 0.0, %v408
    %v410 = vpop.f32.mrf.mxu0
    %v411 = vpop.f32.mrf.mxu0
    %v412 = vadd.f32 0.0, %v411
    %v413 = vpop.f32.mrf.mxu0
    %414 = vmatprep.mubr.bf16.mxu0 %v143
    %415 = vmatmul.mubr.bf16.gmra.mxu0 %v142
    %v416 = vpop.f32.mrf.mxu0
    %v417 = vadd.f32 0.0, %v416
    %v418 = vpop.f32.mrf.mxu0
    %v419 = vpop.f32.mrf.mxu0
    %v420 = vadd.f32 0.0, %v419
    %v421 = vpop.f32.mrf.mxu0
    %422 = vmatprep.mubr.bf16.mxu0 %v145
    %423 = vmatmul.mubr.bf16.gmra.mxu0 %v144
    %v424 = vpop.f32.mrf.mxu0
    %v425 = vadd.f32 0.0, %v424
    %v426 = vpop.f32.mrf.mxu0
    %v427 = vpop.f32.mrf.mxu0
    %v428 = vadd.f32 0.0, %v427
    %v429 = vpop.f32.mrf.mxu0
    %430 = vmatprep.mubr.bf16.mxu0 %v147
    %431 = vmatmul.mubr.bf16.gmra.mxu0 %v146
    %v432 = vpop.f32.mrf.mxu0
    %v433 = vadd.f32 0.0, %v432
    %v434 = vpop.f32.mrf.mxu0
    %v435 = vpop.f32.mrf.mxu0
    %v436 = vadd.f32 0.0, %v435
    %v437 = vpop.f32.mrf.mxu0
    %438 = vmatprep.mubr.bf16.mxu0 %v149
    %439 = vmatmul.mubr.bf16.gmra.mxu0 %v148
    %v440 = vpop.f32.mrf.mxu0
    %v441 = vadd.f32 0.0, %v440
    %v442 = vpop.f32.mrf.mxu0
    %v443 = vpop.f32.mrf.mxu0
    %v444 = vadd.f32 0.0, %v443
    %v445 = vpop.f32.mrf.mxu0
    %446 = vmatprep.mubr.bf16.mxu0 %v151
    %447 = vmatmul.mubr.bf16.gmra.mxu0 %v150
    %v448 = vpop.f32.mrf.mxu0
    %v449 = vadd.f32 0.0, %v448
    %v450 = vpop.f32.mrf.mxu0
    %v451 = vpop.f32.mrf.mxu0
    %v452 = vadd.f32 0.0, %v451
    %v453 = vpop.f32.mrf.mxu0
    %454 = vmatprep.mubr.bf16.mxu0 %v153
    %455 = vmatmul.mubr.bf16.gmra.mxu0 %v152
    %v456 = vpop.f32.mrf.mxu0
    %v457 = vadd.f32 0.0, %v456
    %v458 = vpop.f32.mrf.mxu0
    %v459 = vpop.f32.mrf.mxu0
    %v460 = vadd.f32 0.0, %v459
    %v461 = vpop.f32.mrf.mxu0
    %462 = vmatprep.mubr.bf16.mxu0 %v155
    %463 = vmatmul.mubr.bf16.gmra.mxu0 %v154
    %v464 = vpop.f32.mrf.mxu0
    %v465 = vadd.f32 0.0, %v464
    %v466 = vpop.f32.mrf.mxu0
    %v467 = vpop.f32.mrf.mxu0
    %v468 = vadd.f32 0.0, %v467
    %v469 = vpop.f32.mrf.mxu0
    %470 = vmatprep.mubr.bf16.mxu0 %v157
    %471 = vmatmul.mubr.bf16.gmra.mxu0 %v156
    %v472 = vpop.f32.mrf.mxu0
    %v473 = vadd.f32 0.0, %v472
    %v474 = vpop.f32.mrf.mxu0
    %v475 = vpop.f32.mrf.mxu0
    %v476 = vadd.f32 0.0, %v475
    %v477 = vpop.f32.mrf.mxu0
    %478 = vdwg.mxu0
    %v479 = vadd.f32 %v158, %v353
    %v480 = vadd.f32 %v159, %v356
    %v481 = vadd.f32 %v160, %v361
    %v482 = vadd.f32 %v161, %v364
    %v483 = vadd.f32 %v162, %v369
    %v484 = vadd.f32 %v163, %v372
    %v485 = vadd.f32 %v164, %v377
    %v486 = vadd.f32 %v165, %v380
    %v487 = vadd.f32 %v166, %v385
    %v488 = vadd.f32 %v167, %v388
    %v489 = vadd.f32 %v168, %v393
    %v490 = vadd.f32 %v169, %v396
    %v491 = vadd.f32 %v170, %v401
    %v492 = vadd.f32 %v171, %v404
    %v493 = vadd.f32 %v172, %v409
    %v494 = vadd.f32 %v173, %v412
    %v495 = vadd.f32 %v174, %v417
    %v496 = vadd.f32 %v175, %v420
    %v497 = vadd.f32 %v176, %v425
    %v498 = vadd.f32 %v177, %v428
    %v499 = vadd.f32 %v178, %v433
    %v500 = vadd.f32 %v179, %v436
    %v501 = vadd.f32 %v180, %v441
    %v502 = vadd.f32 %v181, %v444
    %v503 = vadd.f32 %v182, %v449
    %v504 = vadd.f32 %v183, %v452
    %v505 = vadd.f32 %v184, %v457
    %v506 = vadd.f32 %v185, %v460
    %v507 = vadd.f32 %v186, %v465
    %v508 = vadd.f32 %v187, %v468
    %v509 = vadd.f32 %v188, %v473
    %v510 = vadd.f32 %v189, %v476
    %511 = vst [vmem:[#allocation2] sm:$0xff] %v479
    %512 = vst [vmem:[#allocation2 + $0x8] sm:$0xff] %v480
    %513 = vst [vmem:[#allocation2 + $0x10] sm:$0xff] %v481
    %514 = vst [vmem:[#allocation2 + $0x18] sm:$0xff] %v482
    %515 = vst [vmem:[#allocation2 + $0x20] sm:$0xff] %v483
    %516 = vst [vmem:[#allocation2 + $0x28] sm:$0xff] %v484
    %517 = vst [vmem:[#allocation2 + $0x30] sm:$0xff] %v485
    %518 = vst [vmem:[#allocation2 + $0x38] sm:$0xff] %v486
    %519 = vst [vmem:[#allocation2 + $0x40] sm:$0xff] %v487
    %520 = vst [vmem:[#allocation2 + $0x48] sm:$0xff] %v488
    %521 = vst [vmem:[#allocation2 + $0x50] sm:$0xff] %v489
    %522 = vst [vmem:[#allocation2 + $0x58] sm:$0xff] %v490
    %523 = vst [vmem:[#allocation2 + $0x60] sm:$0xff] %v491
    %524 = vst [vmem:[#allocation2 + $0x68] sm:$0xff] %v492
    %525 = vst [vmem:[#allocation2 + $0x70] sm:$0xff] %v493
    %526 = vst [vmem:[#allocation2 + $0x78] sm:$0xff] %v494
    %527 = vst [vmem:[#allocation2 + $0x80] sm:$0xff] %v495
    %528 = vst [vmem:[#allocation2 + $0x88] sm:$0xff] %v496
    %529 = vst [vmem:[#allocation2 + $0x90] sm:$0xff] %v497
    %530 = vst [vmem:[#allocation2 + $0x98] sm:$0xff] %v498
    %531 = vst [vmem:[#allocation2 + $0xa0] sm:$0xff] %v499
    %532 = vst [vmem:[#allocation2 + $0xa8] sm:$0xff] %v500
    %533 = vst [vmem:[#allocation2 + $0xb0] sm:$0xff] %v501
    %534 = vst [vmem:[#allocation2 + $0xb8] sm:$0xff] %v502
    %535 = vst [vmem:[#allocation2 + $0xc0] sm:$0xff] %v503
    %536 = vst [vmem:[#allocation2 + $0xc8] sm:$0xff] %v504
    %537 = vst [vmem:[#allocation2 + $0xd0] sm:$0xff] %v505
    %538 = vst [vmem:[#allocation2 + $0xd8] sm:$0xff] %v506
    %539 = vst [vmem:[#allocation2 + $0xe0] sm:$0xff] %v507
    %540 = vst [vmem:[#allocation2 + $0xe8] sm:$0xff] %v508
    %541 = vst [vmem:[#allocation2 + $0xf0] sm:$0xff] %v509
    %542 = vst [vmem:[#allocation2 + $0xf8] sm:$0xff] %v510
    %v543 = vld [vmem:[#allocation3] sm:$0xff]
    %v544 = vld [vmem:[#allocation3 + $0x8] sm:$0xff]
    %v545 = vld [vmem:[#allocation3 + $0x10] sm:$0xff]
    %v546 = vld [vmem:[#allocation3 + $0x18] sm:$0xff]
    %v547 = vld [vmem:[#allocation3 + $0x20] sm:$0xff]
    %v548 = vld [vmem:[#allocation3 + $0x28] sm:$0xff]
    %v549 = vld [vmem:[#allocation3 + $0x30] sm:$0xff]
    %v550 = vld [vmem:[#allocation3 + $0x38] sm:$0xff]
    %v551 = vld [vmem:[#allocation3 + $0x40] sm:$0xff]
    %v552 = vld [vmem:[#allocation3 + $0x48] sm:$0xff]
    %v553 = vld [vmem:[#allocation3 + $0x50] sm:$0xff]
    %v554 = vld [vmem:[#allocation3 + $0x58] sm:$0xff]
    %v555 = vld [vmem:[#allocation3 + $0x60] sm:$0xff]
    %v556 = vld [vmem:[#allocation3 + $0x68] sm:$0xff]
    %v557 = vld [vmem:[#allocation3 + $0x70] sm:$0xff]
    %v558 = vld [vmem:[#allocation3 + $0x78] sm:$0xff]
    %v559 = vld [vmem:[#allocation3 + $0x80] sm:$0xff]
    %v560 = vld [vmem:[#allocation3 + $0x88] sm:$0xff]
    %v561 = vld [vmem:[#allocation3 + $0x90] sm:$0xff]
    %v562 = vld [vmem:[#allocation3 + $0x98] sm:$0xff]
    %v563 = vld [vmem:[#allocation3 + $0xa0] sm:$0xff]
    %v564 = vld [vmem:[#allocation3 + $0xa8] sm:$0xff]
    %v565 = vld [vmem:[#allocation3 + $0xb0] sm:$0xff]
    %v566 = vld [vmem:[#allocation3 + $0xb8] sm:$0xff]
    %v567 = vld [vmem:[#allocation3 + $0xc0] sm:$0xff]
    %v568 = vld [vmem:[#allocation3 + $0xc8] sm:$0xff]
    %v569 = vld [vmem:[#allocation3 + $0xd0] sm:$0xff]
    %v570 = vld [vmem:[#allocation3 + $0xd8] sm:$0xff]
    %v571 = vld [vmem:[#allocation3 + $0xe0] sm:$0xff]
    %v572 = vld [vmem:[#allocation3 + $0xe8] sm:$0xff]
    %v573 = vld [vmem:[#allocation3 + $0xf0] sm:$0xff]
    %v574 = vld [vmem:[#allocation3 + $0xf8] sm:$0xff]
    %v575 = vunpack.c.l.bf16 %v126
    %v576 = vunpack.c.l.bf16 %v127
    %v577 = vunpack.c.h.bf16 %v126
    %v578 = vunpack.c.h.bf16 %v127
    %v579 = vunpack.c.l.bf16 %v128
    %v580 = vunpack.c.l.bf16 %v129
    %v581 = vunpack.c.h.bf16 %v128
    %v582 = vunpack.c.h.bf16 %v129
    %v583 = vunpack.c.l.bf16 %v130
    %v584 = vunpack.c.l.bf16 %v131
    %v585 = vunpack.c.h.bf16 %v130
    %v586 = vunpack.c.h.bf16 %v131
    %v587 = vunpack.c.l.bf16 %v132
    %v588 = vunpack.c.l.bf16 %v133
    %v589 = vunpack.c.h.bf16 %v132
    %v590 = vunpack.c.h.bf16 %v133
    %v591 = vunpack.c.l.bf16 %v134
    %v592 = vunpack.c.l.bf16 %v135
    %v593 = vunpack.c.h.bf16 %v134
    %v594 = vunpack.c.h.bf16 %v135
    %v595 = vunpack.c.l.bf16 %v136
    %v596 = vunpack.c.l.bf16 %v137
    %v597 = vunpack.c.h.bf16 %v136
    %v598 = vunpack.c.h.bf16 %v137
    %v599 = vunpack.c.l.bf16 %v138
    %v600 = vunpack.c.l.bf16 %v139
    %v601 = vunpack.c.h.bf16 %v138
    %v602 = vunpack.c.h.bf16 %v139
    %v603 = vunpack.c.l.bf16 %v140
    %v604 = vunpack.c.l.bf16 %v141
    %v605 = vunpack.c.h.bf16 %v140
    %v606 = vunpack.c.h.bf16 %v141
    %v607 = vunpack.c.l.bf16 %v142
    %v608 = vunpack.c.l.bf16 %v143
    %v609 = vunpack.c.h.bf16 %v142
    %v610 = vunpack.c.h.bf16 %v143
    %v611 = vunpack.c.l.bf16 %v144
    %v612 = vunpack.c.l.bf16 %v145
    %v613 = vunpack.c.h.bf16 %v144
    %v614 = vunpack.c.h.bf16 %v145
    %v615 = vunpack.c.l.bf16 %v146
    %v616 = vunpack.c.l.bf16 %v147
    %v617 = vunpack.c.h.bf16 %v146
    %v618 = vunpack.c.h.bf16 %v147
    %v619 = vunpack.c.l.bf16 %v148
    %v620 = vunpack.c.l.bf16 %v149
    %v621 = vunpack.c.h.bf16 %v148
    %v622 = vunpack.c.h.bf16 %v149
    %v623 = vunpack.c.l.bf16 %v150
    %v624 = vunpack.c.l.bf16 %v151
    %v625 = vunpack.c.h.bf16 %v150
    %v626 = vunpack.c.h.bf16 %v151
    %v627 = vunpack.c.l.bf16 %v152
    %v628 = vunpack.c.l.bf16 %v153
    %v629 = vunpack.c.h.bf16 %v152
    %v630 = vunpack.c.h.bf16 %v153
    %v631 = vunpack.c.l.bf16 %v154
    %v632 = vunpack.c.l.bf16 %v155
    %v633 = vunpack.c.h.bf16 %v154
    %v634 = vunpack.c.h.bf16 %v155
    %v635 = vunpack.c.l.bf16 %v156
    %v636 = vunpack.c.l.bf16 %v157
    %v637 = vunpack.c.h.bf16 %v156
    %v638 = vunpack.c.h.bf16 %v157
    %v639 = vadd.f32 %v575, %v576
    %640 = vadd.xlane.f32.xlu0 %v639
    %v641 = vpop.xlane.xlu0 %640
    %v642 = vadd.f32 %v577, %v578
    %643 = vadd.xlane.f32.xlu0 %v642
    %v644 = vpop.xlane.xlu0 %643
    %v645 = vadd.f32 %v579, %v580
    %646 = vadd.xlane.f32.xlu0 %v645
    %v647 = vpop.xlane.xlu0 %646
    %v648 = vadd.f32 %v581, %v582
    %649 = vadd.xlane.f32.xlu0 %v648
    %v650 = vpop.xlane.xlu0 %649
    %v651 = vadd.f32 %v583, %v584
    %652 = vadd.xlane.f32.xlu0 %v651
    %v653 = vpop.xlane.xlu0 %652
    %v654 = vadd.f32 %v585, %v586
    %655 = vadd.xlane.f32.xlu0 %v654
    %v656 = vpop.xlane.xlu0 %655
    %v657 = vadd.f32 %v587, %v588
    %658 = vadd.xlane.f32.xlu0 %v657
    %v659 = vpop.xlane.xlu0 %658
    %v660 = vadd.f32 %v589, %v590
    %661 = vadd.xlane.f32.xlu0 %v660
    %v662 = vpop.xlane.xlu0 %661
    %v663 = vadd.f32 %v591, %v592
    %664 = vadd.xlane.f32.xlu0 %v663
    %v665 = vpop.xlane.xlu0 %664
    %v666 = vadd.f32 %v593, %v594
    %667 = vadd.xlane.f32.xlu0 %v666
    %v668 = vpop.xlane.xlu0 %667
    %v669 = vadd.f32 %v595, %v596
    %670 = vadd.xlane.f32.xlu0 %v669
    %v671 = vpop.xlane.xlu0 %670
    %v672 = vadd.f32 %v597, %v598
    %673 = vadd.xlane.f32.xlu0 %v672
    %v674 = vpop.xlane.xlu0 %673
    %v675 = vadd.f32 %v599, %v600
    %676 = vadd.xlane.f32.xlu0 %v675
    %v677 = vpop.xlane.xlu0 %676
    %v678 = vadd.f32 %v601, %v602
    %679 = vadd.xlane.f32.xlu0 %v678
    %v680 = vpop.xlane.xlu0 %679
    %v681 = vadd.f32 %v603, %v604
    %682 = vadd.xlane.f32.xlu0 %v681
    %v683 = vpop.xlane.xlu0 %682
    %v684 = vadd.f32 %v605, %v606
    %685 = vadd.xlane.f32.xlu0 %v684
    %v686 = vpop.xlane.xlu0 %685
    %v687 = vadd.f32 %v607, %v608
    %688 = vadd.xlane.f32.xlu0 %v687
    %v689 = vpop.xlane.xlu0 %688
    %v690 = vadd.f32 %v609, %v610
    %691 = vadd.xlane.f32.xlu0 %v690
    %v692 = vpop.xlane.xlu0 %691
    %v693 = vadd.f32 %v611, %v612
    %694 = vadd.xlane.f32.xlu0 %v693
    %v695 = vpop.xlane.xlu0 %694
    %v696 = vadd.f32 %v613, %v614
    %697 = vadd.xlane.f32.xlu0 %v696
    %v698 = vpop.xlane.xlu0 %697
    %v699 = vadd.f32 %v615, %v616
    %700 = vadd.xlane.f32.xlu0 %v699
    %v701 = vpop.xlane.xlu0 %700
    %v702 = vadd.f32 %v617, %v618
    %703 = vadd.xlane.f32.xlu0 %v702
    %v704 = vpop.xlane.xlu0 %703
    %v705 = vadd.f32 %v619, %v620
    %706 = vadd.xlane.f32.xlu0 %v705
    %v707 = vpop.xlane.xlu0 %706
    %v708 = vadd.f32 %v621, %v622
    %709 = vadd.xlane.f32.xlu0 %v708
    %v710 = vpop.xlane.xlu0 %709
    %v711 = vadd.f32 %v623, %v624
    %712 = vadd.xlane.f32.xlu0 %v711
    %v713 = vpop.xlane.xlu0 %712
    %v714 = vadd.f32 %v625, %v626
    %715 = vadd.xlane.f32.xlu0 %v714
    %v716 = vpop.xlane.xlu0 %715
    %v717 = vadd.f32 %v627, %v628
    %718 = vadd.xlane.f32.xlu0 %v717
    %v719 = vpop.xlane.xlu0 %718
    %v720 = vadd.f32 %v629, %v630
    %721 = vadd.xlane.f32.xlu0 %v720
    %v722 = vpop.xlane.xlu0 %721
    %v723 = vadd.f32 %v631, %v632
    %724 = vadd.xlane.f32.xlu0 %v723
    %v725 = vpop.xlane.xlu0 %724
    %v726 = vadd.f32 %v633, %v634
    %727 = vadd.xlane.f32.xlu0 %v726
    %v728 = vpop.xlane.xlu0 %727
    %v729 = vadd.f32 %v635, %v636
    %730 = vadd.xlane.f32.xlu0 %v729
    %v731 = vpop.xlane.xlu0 %730
    %v732 = vadd.f32 %v637, %v638
    %733 = vadd.xlane.f32.xlu0 %v732
    %v734 = vpop.xlane.xlu0 %733
    %v735 = vadd.f32 %v543, %v641
    %v736 = vadd.f32 %v544, %v644
    %v737 = vadd.f32 %v545, %v647
    %v738 = vadd.f32 %v546, %v650
    %v739 = vadd.f32 %v547, %v653
    %v740 = vadd.f32 %v548, %v656
    %v741 = vadd.f32 %v549, %v659
    %v742 = vadd.f32 %v550, %v662
    %v743 = vadd.f32 %v551, %v665
    %v744 = vadd.f32 %v552, %v668
    %v745 = vadd.f32 %v553, %v671
    %v746 = vadd.f32 %v554, %v674
    %v747 = vadd.f32 %v555, %v677
    %v748 = vadd.f32 %v556, %v680
    %v749 = vadd.f32 %v557, %v683
    %v750 = vadd.f32 %v558, %v686
    %v751 = vadd.f32 %v559, %v689
    %v752 = vadd.f32 %v560, %v692
    %v753 = vadd.f32 %v561, %v695
    %v754 = vadd.f32 %v562, %v698
    %v755 = vadd.f32 %v563, %v701
    %v756 = vadd.f32 %v564, %v704
    %v757 = vadd.f32 %v565, %v707
    %v758 = vadd.f32 %v566, %v710
    %v759 = vadd.f32 %v567, %v713
    %v760 = vadd.f32 %v568, %v716
    %v761 = vadd.f32 %v569, %v719
    %v762 = vadd.f32 %v570, %v722
    %v763 = vadd.f32 %v571, %v725
    %v764 = vadd.f32 %v572, %v728
    %v765 = vadd.f32 %v573, %v731
    %v766 = vadd.f32 %v574, %v734
    %vm767 = vcmask 7168
    %768 = vst.msk [vmem:[#allocation3] sm:$0xff] %vm767, %v735
    %769 = vst.msk [vmem:[#allocation3 + $0x8] sm:$0xff] %vm767, %v736
    %770 = vst.msk [vmem:[#allocation3 + $0x10] sm:$0xff] %vm767, %v737
    %771 = vst.msk [vmem:[#allocation3 + $0x18] sm:$0xff] %vm767, %v738
    %772 = vst.msk [vmem:[#allocation3 + $0x20] sm:$0xff] %vm767, %v739
    %773 = vst.msk [vmem:[#allocation3 + $0x28] sm:$0xff] %vm767, %v740
    %774 = vst.msk [vmem:[#allocation3 + $0x30] sm:$0xff] %vm767, %v741
    %775 = vst.msk [vmem:[#allocation3 + $0x38] sm:$0xff] %vm767, %v742
    %776 = vst.msk [vmem:[#allocation3 + $0x40] sm:$0xff] %vm767, %v743
    %777 = vst.msk [vmem:[#allocation3 + $0x48] sm:$0xff] %vm767, %v744
    %778 = vst.msk [vmem:[#allocation3 + $0x50] sm:$0xff] %vm767, %v745
    %779 = vst.msk [vmem:[#allocation3 + $0x58] sm:$0xff] %vm767, %v746
    %780 = vst.msk [vmem:[#allocation3 + $0x60] sm:$0xff] %vm767, %v747
    %781 = vst.msk [vmem:[#allocation3 + $0x68] sm:$0xff] %vm767, %v748
    %782 = vst.msk [vmem:[#allocation3 + $0x70] sm:$0xff] %vm767, %v749
    %783 = vst.msk [vmem:[#allocation3 + $0x78] sm:$0xff] %vm767, %v750
    %784 = vst.msk [vmem:[#allocation3 + $0x80] sm:$0xff] %vm767, %v751
    %785 = vst.msk [vmem:[#allocation3 + $0x88] sm:$0xff] %vm767, %v752
    %786 = vst.msk [vmem:[#allocation3 + $0x90] sm:$0xff] %vm767, %v753
    %787 = vst.msk [vmem:[#allocation3 + $0x98] sm:$0xff] %vm767, %v754
    %788 = vst.msk [vmem:[#allocation3 + $0xa0] sm:$0xff] %vm767, %v755
    %789 = vst.msk [vmem:[#allocation3 + $0xa8] sm:$0xff] %vm767, %v756
    %790 = vst.msk [vmem:[#allocation3 + $0xb0] sm:$0xff] %vm767, %v757
    %791 = vst.msk [vmem:[#allocation3 + $0xb8] sm:$0xff] %vm767, %v758
    %792 = vst.msk [vmem:[#allocation3 + $0xc0] sm:$0xff] %vm767, %v759
    %793 = vst.msk [vmem:[#allocation3 + $0xc8] sm:$0xff] %vm767, %v760
    %794 = vst.msk [vmem:[#allocation3 + $0xd0] sm:$0xff] %vm767, %v761
    %795 = vst.msk [vmem:[#allocation3 + $0xd8] sm:$0xff] %vm767, %v762
    %796 = vst.msk [vmem:[#allocation3 + $0xe0] sm:$0xff] %vm767, %v763
    %797 = vst.msk [vmem:[#allocation3 + $0xe8] sm:$0xff] %vm767, %v764
    %798 = vst.msk [vmem:[#allocation3 + $0xf0] sm:$0xff] %vm767, %v765
    %799 = vst.msk [vmem:[#allocation3 + $0xf8] sm:$0xff] %vm767, %v766
    // Predicated region
    $region22: #{tpu_custom_call.1} parent=1 // pred_check
      %p800 = pneg %p41
    $region23: #{tpu_custom_call.1} parent=1 // pred_check_branch
      %802 = sbr.rel (%p800) target = $region25
    $region24: #{tpu_custom_call.1} parent=1 // pred_region
      %v803 = vld [vmem:[#allocation3] sm:$0xff]
      %v804 = vld [vmem:[#allocation3 + $0x8] sm:$0xff]
      %v805 = vld [vmem:[#allocation3 + $0x10] sm:$0xff]
      %v806 = vld [vmem:[#allocation3 + $0x18] sm:$0xff]
      %v807 = vld [vmem:[#allocation3 + $0x20] sm:$0xff]
      %v808 = vld [vmem:[#allocation3 + $0x28] sm:$0xff]
      %v809 = vld [vmem:[#allocation3 + $0x30] sm:$0xff]
      %v810 = vld [vmem:[#allocation3 + $0x38] sm:$0xff]
      %v811 = vld [vmem:[#allocation3 + $0x40] sm:$0xff]
      %v812 = vld [vmem:[#allocation3 + $0x48] sm:$0xff]
      %v813 = vld [vmem:[#allocation3 + $0x50] sm:$0xff]
      %v814 = vld [vmem:[#allocation3 + $0x58] sm:$0xff]
      %v815 = vld [vmem:[#allocation3 + $0x60] sm:$0xff]
      %v816 = vld [vmem:[#allocation3 + $0x68] sm:$0xff]
      %v817 = vld [vmem:[#allocation3 + $0x70] sm:$0xff]
      %v818 = vld [vmem:[#allocation3 + $0x78] sm:$0xff]
      %v819 = vld [vmem:[#allocation3 + $0x80] sm:$0xff]
      %v820 = vld [vmem:[#allocation3 + $0x88] sm:$0xff]
      %v821 = vld [vmem:[#allocation3 + $0x90] sm:$0xff]
      %v822 = vld [vmem:[#allocation3 + $0x98] sm:$0xff]
      %v823 = vld [vmem:[#allocation3 + $0xa0] sm:$0xff]
      %v824 = vld [vmem:[#allocation3 + $0xa8] sm:$0xff]
      %v825 = vld [vmem:[#allocation3 + $0xb0] sm:$0xff]
      %v826 = vld [vmem:[#allocation3 + $0xb8] sm:$0xff]
      %v827 = vld [vmem:[#allocation3 + $0xc0] sm:$0xff]
      %v828 = vld [vmem:[#allocation3 + $0xc8] sm:$0xff]
      %v829 = vld [vmem:[#allocation3 + $0xd0] sm:$0xff]
      %v830 = vld [vmem:[#allocation3 + $0xd8] sm:$0xff]
      %v831 = vld [vmem:[#allocation3 + $0xe0] sm:$0xff]
      %v832 = vld [vmem:[#allocation3 + $0xe8] sm:$0xff]
      %v833 = vld [vmem:[#allocation3 + $0xf0] sm:$0xff]
      %v834 = vld [vmem:[#allocation3 + $0xf8] sm:$0xff]
      %v835 = vmax.f32 %v803, 1.0
      %v836 = vmax.f32 %v804, 1.0
      %v837 = vmax.f32 %v805, 1.0
      %v838 = vmax.f32 %v806, 1.0
      %v839 = vmax.f32 %v807, 1.0
      %v840 = vmax.f32 %v808, 1.0
      %v841 = vmax.f32 %v809, 1.0
      %v842 = vmax.f32 %v810, 1.0
      %v843 = vmax.f32 %v811, 1.0
      %v844 = vmax.f32 %v812, 1.0
      %v845 = vmax.f32 %v813, 1.0
      %v846 = vmax.f32 %v814, 1.0
      %v847 = vmax.f32 %v815, 1.0
      %v848 = vmax.f32 %v816, 1.0
      %v849 = vmax.f32 %v817, 1.0
      %v850 = vmax.f32 %v818, 1.0
      %v851 = vmax.f32 %v819, 1.0
      %v852 = vmax.f32 %v820, 1.0
      %v853 = vmax.f32 %v821, 1.0
      %v854 = vmax.f32 %v822, 1.0
      %v855 = vmax.f32 %v823, 1.0
      %v856 = vmax.f32 %v824, 1.0
      %v857 = vmax.f32 %v825, 1.0
      %v858 = vmax.f32 %v826, 1.0
      %v859 = vmax.f32 %v827, 1.0
      %v860 = vmax.f32 %v828, 1.0
      %v861 = vmax.f32 %v829, 1.0
      %v862 = vmax.f32 %v830, 1.0
      %v863 = vmax.f32 %v831, 1.0
      %v864 = vmax.f32 %v832, 1.0
      %v865 = vmax.f32 %v833, 1.0
      %v866 = vmax.f32 %v834, 1.0
      %v867 = vrsqrt.pop %v835
      %v868 = vrsqrt.pop %v836
      %v869 = vrsqrt.pop %v837
      %v870 = vrsqrt.pop %v838
      %v871 = vrsqrt.pop %v839
      %v872 = vrsqrt.pop %v840
      %v873 = vrsqrt.pop %v841
      %v874 = vrsqrt.pop %v842
      %v875 = vrsqrt.pop %v843
      %v876 = vrsqrt.pop %v844
      %v877 = vrsqrt.pop %v845
      %v878 = vrsqrt.pop %v846
      %v879 = vrsqrt.pop %v847
      %v880 = vrsqrt.pop %v848
      %v881 = vrsqrt.pop %v849
      %v882 = vrsqrt.pop %v850
      %v883 = vrsqrt.pop %v851
      %v884 = vrsqrt.pop %v852
      %v885 = vrsqrt.pop %v853
      %v886 = vrsqrt.pop %v854
      %v887 = vrsqrt.pop %v855
      %v888 = vrsqrt.pop %v856
      %v889 = vrsqrt.pop %v857
      %v890 = vrsqrt.pop %v858
      %v891 = vrsqrt.pop %v859
      %v892 = vrsqrt.pop %v860
      %v893 = vrsqrt.pop %v861
      %v894 = vrsqrt.pop %v862
      %v895 = vrsqrt.pop %v863
      %v896 = vrsqrt.pop %v864
      %v897 = vrsqrt.pop %v865
      %v898 = vrsqrt.pop %v866
      %v899 = vld [vmem:[#allocation2] sm:$0xff]
      %v900 = vld [vmem:[#allocation2 + $0x8] sm:$0xff]
      %v901 = vld [vmem:[#allocation2 + $0x10] sm:$0xff]
      %v902 = vld [vmem:[#allocation2 + $0x18] sm:$0xff]
      %v903 = vld [vmem:[#allocation2 + $0x20] sm:$0xff]
      %v904 = vld [vmem:[#allocation2 + $0x28] sm:$0xff]
      %v905 = vld [vmem:[#allocation2 + $0x30] sm:$0xff]
      %v906 = vld [vmem:[#allocation2 + $0x38] sm:$0xff]
      %v907 = vld [vmem:[#allocation2 + $0x40] sm:$0xff]
      %v908 = vld [vmem:[#allocation2 + $0x48] sm:$0xff]
      %v909 = vld [vmem:[#allocation2 + $0x50] sm:$0xff]
      %v910 = vld [vmem:[#allocation2 + $0x58] sm:$0xff]
      %v911 = vld [vmem:[#allocation2 + $0x60] sm:$0xff]
      %v912 = vld [vmem:[#allocation2 + $0x68] sm:$0xff]
      %v913 = vld [vmem:[#allocation2 + $0x70] sm:$0xff]
      %v914 = vld [vmem:[#allocation2 + $0x78] sm:$0xff]
      %v915 = vld [vmem:[#allocation2 + $0x80] sm:$0xff]
      %v916 = vld [vmem:[#allocation2 + $0x88] sm:$0xff]
      %v917 = vld [vmem:[#allocation2 + $0x90] sm:$0xff]
      %v918 = vld [vmem:[#allocation2 + $0x98] sm:$0xff]
      %v919 = vld [vmem:[#allocation2 + $0xa0] sm:$0xff]
      %v920 = vld [vmem:[#allocation2 + $0xa8] sm:$0xff]
      %v921 = vld [vmem:[#allocation2 + $0xb0] sm:$0xff]
      %v922 = vld [vmem:[#allocation2 + $0xb8] sm:$0xff]
      %v923 = vld [vmem:[#allocation2 + $0xc0] sm:$0xff]
      %v924 = vld [vmem:[#allocation2 + $0xc8] sm:$0xff]
      %v925 = vld [vmem:[#allocation2 + $0xd0] sm:$0xff]
      %v926 = vld [vmem:[#allocation2 + $0xd8] sm:$0xff]
      %v927 = vld [vmem:[#allocation2 + $0xe0] sm:$0xff]
      %v928 = vld [vmem:[#allocation2 + $0xe8] sm:$0xff]
      %v929 = vld [vmem:[#allocation2 + $0xf0] sm:$0xff]
      %v930 = vld [vmem:[#allocation2 + $0xf8] sm:$0xff]
      %932 = vset.pattern.permute.xlu0 0
      %933 = vperm.xlu0 %932, %v867
      %v934 = vpop.permute.xlu0 %933
      %937 = vset.pattern.permute.xlu0 0
      %938 = vperm.xlu0 %937, %v868
      %v939 = vpop.permute.xlu0 %938
      %942 = vset.pattern.permute.xlu0 0
      %943 = vperm.xlu0 %942, %v869
      %v944 = vpop.permute.xlu0 %943
      %947 = vset.pattern.permute.xlu0 0
      %948 = vperm.xlu0 %947, %v870
      %v949 = vpop.permute.xlu0 %948
      %952 = vset.pattern.permute.xlu0 0
      %953 = vperm.xlu0 %952, %v871
      %v954 = vpop.permute.xlu0 %953
      %957 = vset.pattern.permute.xlu0 0
      %958 = vperm.xlu0 %957, %v872
      %v959 = vpop.permute.xlu0 %958
      %962 = vset.pattern.permute.xlu0 0
      %963 = vperm.xlu0 %962, %v873
      %v964 = vpop.permute.xlu0 %963
      %967 = vset.pattern.permute.xlu0 0
      %968 = vperm.xlu0 %967, %v874
      %v969 = vpop.permute.xlu0 %968
      %972 = vset.pattern.permute.xlu0 0
      %973 = vperm.xlu0 %972, %v875
      %v974 = vpop.permute.xlu0 %973
      %977 = vset.pattern.permute.xlu0 0
      %978 = vperm.xlu0 %977, %v876
      %v979 = vpop.permute.xlu0 %978
      %982 = vset.pattern.permute.xlu0 0
      %983 = vperm.xlu0 %982, %v877
      %v984 = vpop.permute.xlu0 %983
      %987 = vset.pattern.permute.xlu0 0
      %988 = vperm.xlu0 %987, %v878
      %v989 = vpop.permute.xlu0 %988
      %992 = vset.pattern.permute.xlu0 0
      %993 = vperm.xlu0 %992, %v879
      %v994 = vpop.permute.xlu0 %993
      %997 = vset.pattern.permute.xlu0 0
      %998 = vperm.xlu0 %997, %v880
      %v999 = vpop.permute.xlu0 %998
      %1002 = vset.pattern.permute.xlu0 0
      %1003 = vperm.xlu0 %1002, %v881
      %v1004 = vpop.permute.xlu0 %1003
      %1007 = vset.pattern.permute.xlu0 0
      %1008 = vperm.xlu0 %1007, %v882
      %v1009 = vpop.permute.xlu0 %1008
      %1012 = vset.pattern.permute.xlu0 0
      %1013 = vperm.xlu0 %1012, %v883
      %v1014 = vpop.permute.xlu0 %1013
      %1017 = vset.pattern.permute.xlu0 0
      %1018 = vperm.xlu0 %1017, %v884
      %v1019 = vpop.permute.xlu0 %1018
      %1022 = vset.pattern.permute.xlu0 0
      %1023 = vperm.xlu0 %1022, %v885
      %v1024 = vpop.permute.xlu0 %1023
      %1027 = vset.pattern.permute.xlu0 0
      %1028 = vperm.xlu0 %1027, %v886
      %v1029 = vpop.permute.xlu0 %1028
      %1032 = vset.pattern.permute.xlu0 0
      %1033 = vperm.xlu0 %1032, %v887
      %v1034 = vpop.permute.xlu0 %1033
      %1037 = vset.pattern.permute.xlu0 0
      %1038 = vperm.xlu0 %1037, %v888
      %v1039 = vpop.permute.xlu0 %1038
      %1042 = vset.pattern.permute.xlu0 0
      %1043 = vperm.xlu0 %1042, %v889
      %v1044 = vpop.permute.xlu0 %1043
      %1047 = vset.pattern.permute.xlu0 0
      %1048 = vperm.xlu0 %1047, %v890
      %v1049 = vpop.permute.xlu0 %1048
      %1052 = vset.pattern.permute.xlu0 0
      %1053 = vperm.xlu0 %1052, %v891
      %v1054 = vpop.permute.xlu0 %1053
      %1057 = vset.pattern.permute.xlu0 0
      %1058 = vperm.xlu0 %1057, %v892
      %v1059 = vpop.permute.xlu0 %1058
      %1062 = vset.pattern.permute.xlu0 0
      %1063 = vperm.xlu0 %1062, %v893
      %v1064 = vpop.permute.xlu0 %1063
      %1067 = vset.pattern.permute.xlu0 0
      %1068 = vperm.xlu0 %1067, %v894
      %v1069 = vpop.permute.xlu0 %1068
      %1072 = vset.pattern.permute.xlu0 0
      %1073 = vperm.xlu0 %1072, %v895
      %v1074 = vpop.permute.xlu0 %1073
      %1077 = vset.pattern.permute.xlu0 0
      %1078 = vperm.xlu0 %1077, %v896
      %v1079 = vpop.permute.xlu0 %1078
      %1082 = vset.pattern.permute.xlu0 0
      %1083 = vperm.xlu0 %1082, %v897
      %v1084 = vpop.permute.xlu0 %1083
      %1087 = vset.pattern.permute.xlu0 0
      %1088 = vperm.xlu0 %1087, %v898
      %v1089 = vpop.permute.xlu0 %1088
      %v1091 = vmul.f32 %v899, %v934
      %v1092 = vmul.f32 %v900, %v939
      %v1093 = vmul.f32 %v901, %v944
      %v1094 = vmul.f32 %v902, %v949
      %v1095 = vmul.f32 %v903, %v954
      %v1096 = vmul.f32 %v904, %v959
      %v1097 = vmul.f32 %v905, %v964
      %v1098 = vmul.f32 %v906, %v969
      %v1099 = vmul.f32 %v907, %v974
      %v1100 = vmul.f32 %v908, %v979
      %v1101 = vmul.f32 %v909, %v984
      %v1102 = vmul.f32 %v910, %v989
      %v1103 = vmul.f32 %v911, %v994
      %v1104 = vmul.f32 %v912, %v999
      %v1105 = vmul.f32 %v913, %v1004
      %v1106 = vmul.f32 %v914, %v1009
      %v1107 = vmul.f32 %v915, %v1014
      %v1108 = vmul.f32 %v916, %v1019
      %v1109 = vmul.f32 %v917, %v1024
      %v1110 = vmul.f32 %v918, %v1029
      %v1111 = vmul.f32 %v919, %v1034
      %v1112 = vmul.f32 %v920, %v1039
      %v1113 = vmul.f32 %v921, %v1044
      %v1114 = vmul.f32 %v922, %v1049
      %v1115 = vmul.f32 %v923, %v1054
      %v1116 = vmul.f32 %v924, %v1059
      %v1117 = vmul.f32 %v925, %v1064
      %v1118 = vmul.f32 %v926, %v1069
      %v1119 = vmul.f32 %v927, %v1074
      %v1120 = vmul.f32 %v928, %v1079
      %v1121 = vmul.f32 %v929, %v1084
      %v1122 = vmul.f32 %v930, %v1089
      %1123 = vst [vmem:[#allocation9] sm:$0xff] %v1091
      %1124 = vst [vmem:[#allocation9 + $0x8] sm:$0xff] %v1092
      %1125 = vst [vmem:[#allocation9 + $0x10] sm:$0xff] %v1093
      %1126 = vst [vmem:[#allocation9 + $0x18] sm:$0xff] %v1094
      %1127 = vst [vmem:[#allocation9 + $0x20] sm:$0xff] %v1095
      %1128 = vst [vmem:[#allocation9 + $0x28] sm:$0xff] %v1096
      %1129 = vst [vmem:[#allocation9 + $0x30] sm:$0xff] %v1097
      %1130 = vst [vmem:[#allocation9 + $0x38] sm:$0xff] %v1098
      %1131 = vst [vmem:[#allocation9 + $0x40] sm:$0xff] %v1099
      %1132 = vst [vmem:[#allocation9 + $0x48] sm:$0xff] %v1100
      %1133 = vst [vmem:[#allocation9 + $0x50] sm:$0xff] %v1101
      %1134 = vst [vmem:[#allocation9 + $0x58] sm:$0xff] %v1102
      %1135 = vst [vmem:[#allocation9 + $0x60] sm:$0xff] %v1103
      %1136 = vst [vmem:[#allocation9 + $0x68] sm:$0xff] %v1104
      %1137 = vst [vmem:[#allocation9 + $0x70] sm:$0xff] %v1105
      %1138 = vst [vmem:[#allocation9 + $0x78] sm:$0xff] %v1106
      %1139 = vst [vmem:[#allocation9 + $0x80] sm:$0xff] %v1107
      %1140 = vst [vmem:[#allocation9 + $0x88] sm:$0xff] %v1108
      %1141 = vst [vmem:[#allocation9 + $0x90] sm:$0xff] %v1109
      %1142 = vst [vmem:[#allocation9 + $0x98] sm:$0xff] %v1110
      %1143 = vst [vmem:[#allocation9 + $0xa0] sm:$0xff] %v1111
      %1144 = vst [vmem:[#allocation9 + $0xa8] sm:$0xff] %v1112
      %1145 = vst [vmem:[#allocation9 + $0xb0] sm:$0xff] %v1113
      %1146 = vst [vmem:[#allocation9 + $0xb8] sm:$0xff] %v1114
      %1147 = vst [vmem:[#allocation9 + $0xc0] sm:$0xff] %v1115
      %1148 = vst [vmem:[#allocation9 + $0xc8] sm:$0xff] %v1116
      %1149 = vst [vmem:[#allocation9 + $0xd0] sm:$0xff] %v1117
      %1150 = vst [vmem:[#allocation9 + $0xd8] sm:$0xff] %v1118
      %1151 = vst [vmem:[#allocation9 + $0xe0] sm:$0xff] %v1119
      %1152 = vst [vmem:[#allocation9 + $0xe8] sm:$0xff] %v1120
      %1153 = vst [vmem:[#allocation9 + $0xf0] sm:$0xff] %v1121
      %1154 = vst [vmem:[#allocation9 + $0xf8] sm:$0xff] %v1122
    $region25: #{tpu_custom_call.1} parent=1 // pred_fallthru
      _
    // Predicated region
    $region26: #{tpu_custom_call.1} parent=1 // pred_check
      _
    $region27: #{tpu_custom_call.1} parent=1 // pred_check_branch
      %1156 = sbr.rel (0) target = $region29
    $region28: #{tpu_custom_call.1} parent=1 // pred_region
      %s1158 = ssub.s32 4096, 4096
      %1159 = vsyncadd [#allocation6], %s1158
      %s1160 = sshll.u32 [#allocation9], 4
      %s1161 = int_to_ptr.vmem [resolvable:$true] %s1160
      %1166 = dma.vmem_to_hbm [thread:$0]  %s1161, 4096, %s2, [#allocation6], 128, 128, 8
    $region29: #{tpu_custom_call.1} parent=1 // pred_fallthru
      _
    // Predicated region
    $region30: #{tpu_custom_call.1} parent=1 // pred_check
      _
    $region31: #{tpu_custom_call.1} parent=1 // pred_check_branch
      %1168 = sbr.rel (0) target = $region33
    $region32: #{tpu_custom_call.1} parent=1 // pred_region
      %1169 = dma.done [#allocation6], 4096
    $region33: #{tpu_custom_call.1} parent=1 // pred_fallthru
      _
    %1170 = vsyncpa [#allocation5], 1
    %1171 = vsyncpa [#allocation8], 1
    %1172 = vsyncpa [#allocation6], 1

</llo_original>
